<compile_context>
chip_gen: v7x
topology: tpu7x:2x2x1
jax: 0.10.0
libtpu: 0.0.40
codegen_flags: <defaults>
</compile_context>

<pallas_src>
import functools

import jax
import jax.numpy as jnp
from jax.experimental import pallas as pl
from jax.experimental.pallas import tpu as pltpu


_LANE_CANDIDATES = (512, 256, 128)      # lane-dense last dims (multiples of 128)
_SMALL_FAST_PATH_BYTES = 256 * 1024     # <= 256 KiB: single full-array block
_MIN_BLOCK_BYTES = 256 * 1024           # reject degenerate tiny tiles


def _identity_kernel(x_ref, o_ref):
    # BaseModel.forward defines no computation; pass the tile through.
    o_ref[...] = x_ref[...]


@functools.lru_cache(maxsize=None)
def _device_tuning():
    """Per-generation (target block bytes, vmem_limit_bytes) for the copy."""
    try:
        kind = jax.devices()[0].device_kind.lower()
    except Exception:  # pragma: no cover - defensive
        kind = ""
    if "v6" in kind:
        # v6e: 128 MiB physical VMEM; bigger tiles amortize the ~0.35 us
        # per-grid-step overhead.  Raise the scoped limit to be safe.
        return 6 * 1024 * 1024, 64 * 1024 * 1024
    if "7" in kind:
        # v7x: 64 MiB physical / 32 MiB scoped default -> 4 MiB per buffer
        # keeps 2x(in+out) double-buffered tiles at ~16 MiB.
        return 4 * 1024 * 1024, None
    # v5e (16 MiB scoped-VMEM default) and conservative fallback for anything
    # unrecognized: 2 MiB/buffer (~8 MiB total) is near-optimal and safe.
    return 2 * 1024 * 1024, None


def _round_up(v: int, m: int) -> int:
    return (v + m - 1) // m * m


def _round_down(v: int, m: int) -> int:
    return (v // m) * m


def _pick_block_rows(rows: int, row_align: int, target_rows: int):
    """Largest multiple of `row_align` that divides `rows` exactly, preferring
    values <= target_rows and <= rows // 2 (>= 2 grid steps so v7x's two
    TensorCores both get work).  Returns None if no aligned divisor exists."""
    if rows % row_align != 0:
        return None
    cap = min(target_rows, max(row_align, _round_down(rows // 2, row_align)))
    cap = max(cap, row_align)
    for cand in range(cap, row_align - 1, -row_align):
        if rows % cand == 0:
            return cand
    return None


def _copy_2d(x2d: jax.Array, block_rows: int, compiler_params) -> jax.Array:
    """Lane-dense streaming identity copy of a 2-D array tiled along rows."""
    rows, cols = x2d.shape
    return pl.pallas_call(
        _identity_kernel,
        out_shape=jax.ShapeDtypeStruct((rows, cols), x2d.dtype),
        grid_spec=pltpu.PrefetchScalarGridSpec(
            num_scalar_prefetch=0,
            grid=(rows // block_rows,),
            in_specs=[pl.BlockSpec((block_rows, cols), lambda i: (i, 0))],
            out_specs=pl.BlockSpec((block_rows, cols), lambda i: (i, 0)),
        ),
        compiler_params=compiler_params,
    )(x2d)


@jax.jit
def base_model_forward(x: jax.Array) -> jax.Array:
    """Identity forward pass (BaseModel.forward has an empty body).

    Accepts any-shaped tensor (e.g. NCHW) and returns a tensor of identical
    shape and dtype, streamed through a lane-dense Pallas TPU copy kernel.
    """
    orig_shape = x.shape
    n = x.size
    dtype = x.dtype
    itemsize = jnp.dtype(dtype).itemsize
    # dtype-dependent sublane alignment: 8 for f32, 16 for bf16, 32 for int8.
    row_align = max(8, 32 // itemsize)
    target_bytes, vmem_limit = _device_tuning()

    cp_kwargs = dict(dimension_semantics=("parallel",))
    if vmem_limit is not None:
        cp_kwargs["vmem_limit_bytes"] = vmem_limit
    compiler_params = pltpu.CompilerParams(**cp_kwargs)

    flat = x.reshape(-1)

    # ---- Small-input fast path: one full-array block, grid=(1,). ----------
    # A block equal to the full array dims bypasses the (8,128) divisibility
    # rule, so no padding and no trailing slice are required.
    if n * itemsize <= _SMALL_FAST_PATH_BYTES:
        if n % 128 == 0:
            x2d = flat.reshape(n // 128, 128)
        else:
            x2d = flat.reshape(1, n)
        out2d = _copy_2d(x2d, x2d.shape[0], compiler_params)
        return out2d.reshape(orig_shape)

    # ---- Large-input tiled streaming copy (no padding). -------------------
    # Find a lane count dividing n and block rows dividing the row count, so
    # the copy needs neither jnp.pad nor a trailing slice.
    for cols in _LANE_CANDIDATES:
        if n % cols != 0:
            continue
        rows = n // cols
        target_rows = max(
            row_align,
            _round_down(target_bytes // (cols * itemsize), row_align),
        )
        block_rows = _pick_block_rows(rows, row_align, target_rows)
        if block_rows is None:
            continue
        if block_rows * cols * itemsize < _MIN_BLOCK_BYTES:
            continue  # degenerate tile (rows has no useful divisor)
        out2d = _copy_2d(flat.reshape(rows, cols), block_rows, compiler_params)
        return out2d.reshape(orig_shape)

    # ---- Ragged fallback: pad to a tileable size, slice afterwards. -------
    # Only reached for large inputs whose element count has no friendly
    # factorization; the extra pad/slice HBM round trip is unavoidable here.
    cols = 512
    rows_needed = pl.cdiv(n, cols)
    target_rows = max(
        row_align, _round_down(target_bytes // (cols * itemsize), row_align)
    )
    block_rows = min(target_rows, _round_up(rows_needed, row_align))
    rows = _round_up(rows_needed, block_rows)
    padded_n = rows * cols
    flat_p = jnp.pad(flat, (0, padded_n - n))
    out2d = _copy_2d(flat_p.reshape(rows, cols), block_rows, compiler_params)
    return out2d.reshape(-1)[:n].reshape(orig_shape)


if __name__ == "__main__":
    key = jax.random.PRNGKey(0)
    # Small NCHW input consistent with a generic image-model base class.
    x = jax.random.normal(key, (2, 4, 16, 16), dtype=jnp.float32)

    y = base_model_forward(x)
    jax.block_until_ready(y)

    # Sanity check: identity semantics, shape and dtype preserved.
    assert y.shape == x.shape and y.dtype == x.dtype
    assert bool(jnp.allclose(y, x))

    print("KERNEL_OK")
</pallas_src>

<mosaic_0001>
module attributes {stable_mosaic.version = 11 : i64} {
  func.func @_identity_kernel(%arg0: i32, %arg1: memref<16x128xf32, #tpu.memory_space<vmem>>, %arg2: memref<16x128xf32, #tpu.memory_space<vmem>>) attributes {dimension_semantics = [#tpu.dimension_semantics<parallel>], iteration_bounds = array<i64: 1>, scalar_prefetch = 0 : i64, scratch_operands = 0 : i64, tpu.core_type = #tpu.core_type<tc>, window_params = [{transform_indices = @transform_0, window_bounds = array<i64: 16, 128>}, {transform_indices = @transform_1, window_bounds = array<i64: 16, 128>}]} {
    %c0 = arith.constant 0 : index
    %c0_0 = arith.constant 0 : index
    %0 = vector.load %arg1[%c0, %c0_0] : memref<16x128xf32, #tpu.memory_space<vmem>>, vector<16x128xf32>
    %c0_1 = arith.constant 0 : index
    %c0_2 = arith.constant 0 : index
    %1 = vector.load %arg2[%c0_1, %c0_2] : memref<16x128xf32, #tpu.memory_space<vmem>>, vector<16x128xf32>
    tpu.vector_store %arg2[%c0_1, %c0_2], %0 {strides = array<i32>} : memref<16x128xf32, #tpu.memory_space<vmem>>, vector<16x128xf32>,
    return
  }
  func.func @transform_0(%arg0: i32) -> (i32, i32) {
    %c0_i32 = arith.constant 0 : i32
    %c0_i32_0 = arith.constant 0 : i32
    return %arg0, %c0_i32 : i32, i32
  }
  func.func @transform_1(%arg0: i32) -> (i32, i32) {
    %c0_i32 = arith.constant 0 : i32
    %c0_i32_0 = arith.constant 0 : i32
    return %arg0, %c0_i32 : i32, i32
  }
}

</mosaic_0001>

<llo_original>
// kernel: base_model_forward.1
$region0: #{base_model_forward.1}
  #allocation0 [shape = 'u32[]', space=smem, size = 0x4, offset = 0x4, fixed_abs, tag = 'smem constant byte address 0x4 - core index']
  #allocation1 [shape = 'u32[144,128]{1,0:T(1,128)}', space=vmem, size = 0x12000, scoped, tag = 'internal scratch']
  %s0 = inlined_call_operand.vmem [shape: f32[16,128], index: 0, kind: input, shape index: {}]
  %s1 = inlined_call_operand.vmem [shape: f32[16,128], index: 1, kind: output, shape index: {}]
  %s2 = sld [smem:[#allocation0]]
  $region14: #{base_model_forward.1} parent=0
    _
  %s4 = ssub.s32 1, %s2
  %s5 = scalar_select 0, %s4, %s2
  // Predicated region
  $region2: #{base_model_forward.1} parent=0 // pred_check
    _
  $region3: #{base_model_forward.1} parent=0 // pred_check_branch
    %7 = sbr.rel (0) target = $region5
  $region4: #{base_model_forward.1} parent=0 // pred_region
    _
  $region5: #{base_model_forward.1} parent=0 // pred_fallthru
    _
  %v8 = vld [vmem:[%s0] sm:$0xff]
  %v9 = vld [vmem:[%s0 + $0x8] sm:$0xff]
  %10 = vst [vmem:[%s1] sm:$0xff] %v8
  %11 = vst [vmem:[%s1 + $0x8] sm:$0xff] %v9
  // Predicated region
  $region6: #{base_model_forward.1} parent=0 // pred_check
    _
  $region7: #{base_model_forward.1} parent=0 // pred_check_branch
    %13 = sbr.rel (0) target = $region9
  $region8: #{base_model_forward.1} parent=0 // pred_region
    _
  $region9: #{base_model_forward.1} parent=0 // pred_fallthru
    _
  // Predicated region
  $region10: #{base_model_forward.1} parent=0 // pred_check
    _
  $region11: #{base_model_forward.1} parent=0 // pred_check_branch
    %15 = sbr.rel (0) target = $region13
  $region12: #{base_model_forward.1} parent=0 // pred_region
    _
  $region13: #{base_model_forward.1} parent=0 // pred_fallthru
    _

</llo_original>
